<compile_context>
chip_gen: v7x
topology: tpu7x:2x2x1
jax: 0.10.0
libtpu: 0.0.40
codegen_flags: <defaults>
</compile_context>

<pallas_src>
import functools

import jax
import jax.numpy as jnp
from jax import lax
from jax.experimental import pallas as pl
from jax.experimental.pallas import tpu as pltpu

_EPS = 1e-5


def _vmem_limit_bytes() -> int:
    """Per-generation scoped-VMEM limit: ~3/4 of physical, capped at 96 MiB.

    128 MiB parts (v5e/v6e) -> 96 MiB; 64 MiB parts (v7x) -> 48 MiB.
    """
    try:
        cap = int(pltpu.get_tpu_info().vmem_capacity_bytes)
        return max(16 << 20, min((cap * 3) // 4, 96 << 20))
    except Exception:  # conservative fallback if the query is unavailable
        return 48 << 20


def _pick_time_tile(l_out, c2, c_out, vmem_limit, max_tile):
    """Return (TL, n_t, L_pad): TL is the full L_out (single tile) or a multiple of 128."""
    max_tile = max(128, max_tile)

    def fits(tl):
        # double-buffered bf16 x block + double-buffered f32 out block + weights + slack
        need = 2 * (c2 * tl * 2) + 2 * (c_out * tl * 4) + 4 * (c_out * c2 * 2) + (1 << 20)
        return need <= vmem_limit // 2

    cap = 128
    t = 128
    while t <= max_tile and fits(t):
        cap = t
        t += 128
    if l_out <= cap:
        return l_out, 1, l_out                     # single full-extent tile, no padding
    n_t = -(-l_out // cap)                         # cdiv
    tl = ((-(-l_out // n_t) + 127) // 128) * 128   # balance tiles, keep lanes aligned
    return tl, n_t, n_t * tl


def _conv_tile(x_ref, zh_ref, w_ref, jj):
    """Conv1d(k=4, s=2, p=1) for one (batch, time-tile) block in NCL layout.

    x_ref : (1, 2C, TL)    bf16, even/odd de-interleaved input columns t0 .. t0+TL-1
    zh_ref: (1, C_out, n_t) f32, precomputed halo contribution w_b @ x[:, t0+TL] per tile
    w_ref : (2, C_out, 2C) bf16, w[0] -> taps k=0,1 (column t); w[1] -> taps k=2,3 (column t+1)
    """
    x = x_ref[0]                                                        # (2C, TL)
    z_a = jnp.dot(w_ref[0], x, preferred_element_type=jnp.float32)      # (C_out, TL)
    z_b = jnp.dot(w_ref[1], x, preferred_element_type=jnp.float32)      # (C_out, TL)
    tl = z_a.shape[1]

    # This tile's halo contribution, selected from the resident (C_out, n_t) slab with an
    # iota mask + lane reduce (avoids lane-width-1 blocks and dynamic lane slicing).
    zh_slab = zh_ref[0]                                                 # (C_out, n_t)
    sel = lax.broadcasted_iota(jnp.int32, zh_slab.shape, 1) == jj
    zh_col = jnp.sum(jnp.where(sel, zh_slab, 0.0), axis=1, keepdims=True)   # (C_out, 1)

    # Shift the k=2,3 contribution one output column left.  Lane-aligned tiles use an XLU
    # rotate (no VMEM copy); the wrapped-around last lane is replaced by the halo term.
    if tl == 1:
        shifted = z_b
    elif tl % 128 == 0:
        shifted = pltpu.roll(z_b, shift=tl - 1, axis=1)
    else:
        shifted = jnp.concatenate([z_b[:, 1:], z_b[:, :1]], axis=1)     # tiny single-tile case
    lane = lax.broadcasted_iota(jnp.int32, z_a.shape, 1)
    return z_a + jnp.where(lane == tl - 1, zh_col, shifted)


def _accum_stats(y, stat_ref, jj, j_inner, *, l_out, tl, mask_tail):
    """Accumulate per-channel sum / sum-of-squares into a lane-dense (1,1,2,C_out) block."""
    if mask_tail:
        t = jj * tl + lax.broadcasted_iota(jnp.int32, y.shape, 1)
        y = jnp.where(t < l_out, y, 0.0)          # padded output columns must not count
    part = jnp.stack([jnp.sum(y, axis=1), jnp.sum(y * y, axis=1)], axis=0)   # (2, C_out)

    @pl.when(j_inner == 0)
    def _():
        stat_ref[...] = jnp.zeros_like(stat_ref)

    stat_ref[...] += part[None, None]


def _stats_kernel(x_ref, zh_ref, w_ref, stat_ref, *, tiles_per_group, l_out, tl, mask_tail):
    j = pl.program_id(2)
    jj = pl.program_id(1) * tiles_per_group + j
    y = _conv_tile(x_ref, zh_ref, w_ref, jj)
    _accum_stats(y, stat_ref, jj, j, l_out=l_out, tl=tl, mask_tail=mask_tail)


def _stats_store_kernel(x_ref, zh_ref, w_ref, stat_ref, y_ref, *,
                        tiles_per_group, l_out, tl, mask_tail):
    j = pl.program_id(2)
    jj = pl.program_id(1) * tiles_per_group + j
    y = _conv_tile(x_ref, zh_ref, w_ref, jj)
    y_ref[0] = y.astype(y_ref.dtype)              # bf16 pre-BN activation for pass 2
    _accum_stats(y, stat_ref, jj, j, l_out=l_out, tl=tl, mask_tail=mask_tail)


def _bn_relu_recompute_kernel(x_ref, zh_ref, w_ref, ss_ref, o_ref):
    y = _conv_tile(x_ref, zh_ref, w_ref, pl.program_id(1))
    o_ref[0] = jnp.maximum(y * ss_ref[:, 0:1] + ss_ref[:, 1:2], 0.0).astype(o_ref.dtype)


def _bn_relu_apply_kernel(y_ref, ss_ref, o_ref):
    y = y_ref[0].astype(jnp.float32)
    o_ref[0] = jnp.maximum(y * ss_ref[:, 0:1] + ss_ref[:, 1:2], 0.0).astype(o_ref.dtype)


def down_forward(x, weight, bias, gamma, beta, *, eps=_EPS, max_time_tile=2048,
                 store_y=None, store_y_min_cin=96):
    """Forward of Down.  x: (N, C_in, L) f32, L even -> (N, 2*C_in, L//2) f32 (NCL layout)."""
    del bias  # conv bias cancels exactly inside training-mode BatchNorm (forward output)
    # TODO(synk): PyTorch training-mode BatchNorm1d also updates running_mean/running_var
    # (where the conv bias / unbiased variance matter); only the forward output is produced.

    N, C_in, L = x.shape
    C_out, C_in_w, K = weight.shape
    assert K == 4 and C_in_w == C_in and C_out == 2 * C_in, "Down expects Conv1d(C, 2C, 4, 2, 1)"
    assert L % 2 == 0 and L >= 2, "Down halves the length; L must be even"
    L_out = L // 2
    C2 = 2 * C_in

    vmem_limit = _vmem_limit_bytes()
    TL, n_t, L_pad = _pick_time_tile(L_out, C2, C_out, vmem_limit, max_time_tile)
    mask_tail = L_pad != L_out
    # Recompute the conv in pass 2 while HBM-bound (small/medium C); store the bf16 pre-BN
    # activation and make pass 2 elementwise once the duplicated MXU work would dominate.
    if store_y is None:
        store_y = C_in >= store_y_min_cin

    # ---- input restructuring: one fused XLA pass over x (no im2col in HBM) ----
    # x_eo[n, p*C_in + c, t] = x_padded[n, c, 2*t + p]; cast once to bf16.
    x_pad = jnp.pad(x, ((0, 0), (0, 0), (1, 1)))
    x_eo_full = (x_pad.reshape(N, C_in, L_out + 1, 2)
                 .transpose(0, 3, 1, 2).reshape(N, C2, L_out + 1))
    # Pad the time axis to L_pad (+1 so every tile has a right-halo column).  Padded input
    # columns are zero, so the (bias-free) conv is zero there; the single boundary column at
    # index L_out is masked out of the statistics below.
    x_eo_big = jnp.pad(
        x_eo_full, ((0, 0), (0, 0), (0, L_pad + 1 - (L_out + 1)))).astype(jnp.bfloat16)
    x_eo = x_eo_big[:, :, :L_pad]                                      # (N, 2C, L_pad)

    # Regroup conv taps to match the even/odd channel stacking.
    w_a = jnp.concatenate([weight[:, :, 0], weight[:, :, 1]], axis=1)  # hits column t
    w_b = jnp.concatenate([weight[:, :, 2], weight[:, :, 3]], axis=1)  # hits column t+1
    w_stack = jnp.stack([w_a, w_b], axis=0).astype(jnp.bfloat16)       # (2, C_out, 2C)

    # Precompute every tile's halo contribution w_b @ x_eo[:, :, (j+1)*TL] (tiny einsum).
    halo_cols = x_eo_big[:, :, TL::TL].astype(jnp.float32)             # (N, 2C, n_t)
    zh = jnp.einsum("oc,ncj->noj", w_stack[1].astype(jnp.float32), halo_cols)  # (N, C_out, n_t)

    # Pass-1 grid: split time tiles into G independent accumulator groups so both TensorCores
    # stay busy even at tiny batch (v7x megacore); harmless elsewhere.
    G = 2 if (n_t >= 2 and n_t % 2 == 0) else 1
    Tg = n_t // G

    x_spec1 = pl.BlockSpec((1, C2, TL), lambda n, g, j: (n, 0, g * Tg + j))
    zh_spec1 = pl.BlockSpec((1, C_out, n_t), lambda n, g, j: (n, 0, 0))
    w_spec1 = pl.BlockSpec((2, C_out, C2), lambda n, g, j: (0, 0, 0))
    stat_spec = pl.BlockSpec((1, 1, 2, C_out), lambda n, g, j: (n, g, 0, 0))

    conv_flops = 4 * N * L_pad * C_out * C2
    in_bytes = x_eo.size * 2 + zh.size * 4 + w_stack.size * 2

    kern1_kwargs = dict(tiles_per_group=Tg, l_out=L_out, tl=TL, mask_tail=mask_tail)
    params1 = pltpu.CompilerParams(
        dimension_semantics=("parallel", "parallel", "arbitrary"),
        vmem_limit_bytes=vmem_limit,
    )

    # ---- pass 1: per-(batch, group, channel) partial sums of the conv output ----
    if store_y:
        stats, y_pre = pl.pallas_call(
            functools.partial(_stats_store_kernel, **kern1_kwargs),
            out_shape=(jax.ShapeDtypeStruct((N, G, 2, C_out), jnp.float32),
                       jax.ShapeDtypeStruct((N, C_out, L_pad), jnp.bfloat16)),
            grid_spec=pltpu.PrefetchScalarGridSpec(
                num_scalar_prefetch=0,
                grid=(N, G, Tg),
                in_specs=[x_spec1, zh_spec1, w_spec1],
                out_specs=(stat_spec,
                           pl.BlockSpec((1, C_out, TL), lambda n, g, j: (n, 0, g * Tg + j))),
            ),
            compiler_params=params1,
            cost_estimate=pl.CostEstimate(
                flops=conv_flops + 3 * N * L_pad * C_out, transcendentals=0,
                bytes_accessed=in_bytes + N * C_out * (L_pad * 2 + G * 2 * 4)),
        )(x_eo, zh, w_stack)
    else:
        stats = pl.pallas_call(
            functools.partial(_stats_kernel, **kern1_kwargs),
            out_shape=jax.ShapeDtypeStruct((N, G, 2, C_out), jnp.float32),
            grid_spec=pltpu.PrefetchScalarGridSpec(
                num_scalar_prefetch=0,
                grid=(N, G, Tg),
                in_specs=[x_spec1, zh_spec1, w_spec1],
                out_specs=stat_spec,
            ),
            compiler_params=params1,
            cost_estimate=pl.CostEstimate(
                flops=conv_flops + 3 * N * L_pad * C_out, transcendentals=0,
                bytes_accessed=in_bytes + N * G * 2 * C_out * 4),
        )(x_eo, zh, w_stack)

    # ---- tiny cross-batch reduction + BN folding in plain JAX (f32) ----
    count = jnp.float32(N * L_out)
    total = jnp.sum(stats, axis=(0, 1))                                # (2, C_out)
    mean = total[0] / count
    # Biased variance via E[y^2] - mean^2 (clamp tiny negative drift).  NOTE: subject to
    # cancellation when |mean| >> std; fine for the forward output, revisit if stats feed training.
    var = jnp.maximum(total[1] / count - mean * mean, 0.0)
    scale = gamma.astype(jnp.float32) * lax.rsqrt(var + eps)
    shift = beta.astype(jnp.float32) - mean * scale
    scale_shift = jnp.stack([scale, shift], axis=1)                    # (C_out, 2)

    # ---- pass 2: normalize + ReLU, writing the NCL output lane-dense ----
    # NOTE: if profiling shows the x_eo DMA exposed (tiny per-tile compute), bump the x block
    # to pipeline_mode=pl.Buffered(3); left at the default depth here (cannot profile in-script).
    params2 = pltpu.CompilerParams(
        dimension_semantics=("parallel", "parallel"),
        vmem_limit_bytes=vmem_limit,
    )
    out_spec = pl.BlockSpec((1, C_out, TL), lambda n, j: (n, 0, j))
    ss_spec = pl.BlockSpec((C_out, 2), lambda n, j: (0, 0))

    if store_y:
        out_padded = pl.pallas_call(
            _bn_relu_apply_kernel,
            out_shape=jax.ShapeDtypeStruct((N, C_out, L_pad), x.dtype),
            grid_spec=pltpu.PrefetchScalarGridSpec(
                num_scalar_prefetch=0,
                grid=(N, n_t),
                in_specs=[pl.BlockSpec((1, C_out, TL), lambda n, j: (n, 0, j)), ss_spec],
                out_specs=out_spec,
            ),
            compiler_params=params2,
            cost_estimate=pl.CostEstimate(
                flops=2 * N * L_pad * C_out, transcendentals=0,
                bytes_accessed=N * C_out * L_pad * (2 + 4)),
        )(y_pre, scale_shift)
    else:
        out_padded = pl.pallas_call(
            _bn_relu_recompute_kernel,
            out_shape=jax.ShapeDtypeStruct((N, C_out, L_pad), x.dtype),
            grid_spec=pltpu.PrefetchScalarGridSpec(
                num_scalar_prefetch=0,
                grid=(N, n_t),
                in_specs=[pl.BlockSpec((1, C2, TL), lambda n, j: (n, 0, j)),
                          pl.BlockSpec((1, C_out, n_t), lambda n, j: (n, 0, 0)),
                          pl.BlockSpec((2, C_out, C2), lambda n, j: (0, 0, 0)),
                          ss_spec],
                out_specs=out_spec,
            ),
            compiler_params=params2,
            cost_estimate=pl.CostEstimate(
                flops=conv_flops + 3 * N * L_pad * C_out, transcendentals=0,
                bytes_accessed=in_bytes + N * C_out * L_pad * 4),
        )(x_eo, zh, w_stack, scale_shift)

    return out_padded[:, :, :L_out] if mask_tail else out_padded


def _reference(x, weight, bias, gamma, beta, eps=_EPS):
    """Pure-JAX replica of the PyTorch forward (conv WITH bias + training BN + ReLU)."""
    N, C_in, L = x.shape
    L_out = L // 2
    K = weight.shape[-1]
    x_pad = jnp.pad(x, ((0, 0), (0, 0), (1, 1)))
    idx = 2 * jnp.arange(L_out)[:, None] + jnp.arange(K)[None, :]
    patches = x_pad[:, :, idx]                                         # (N, C_in, L_out, K)
    y = jnp.einsum("nclk,ock->nol", patches, weight,
                   precision=lax.Precision.HIGHEST) + bias[None, :, None]
    mean = y.mean(axis=(0, 2), keepdims=True)
    var = ((y - mean) ** 2).mean(axis=(0, 2), keepdims=True)
    y = (y - mean) * lax.rsqrt(var + eps) * gamma[None, :, None] + beta[None, :, None]
    return jnp.maximum(y, 0.0)


if __name__ == "__main__":
    key = jax.random.PRNGKey(0)
    cases = [
        # (name, N, C_in, L, kwargs)
        ("small", 2, 4, 16, {}),                                        # single tile, recompute
        ("tiled", 2, 4, 400, dict(max_time_tile=128)),                  # padded tiles + roll + G=2
        ("tiled_store_y", 2, 4, 400, dict(max_time_tile=128, store_y=True)),
    ]
    for idx, (name, N, C_in, L, kwargs) in enumerate(cases):
        C_out, K = 2 * C_in, 4
        ks = jax.random.split(jax.random.fold_in(key, idx), 5)
        x = jax.random.normal(ks[0], (N, C_in, L), dtype=jnp.float32)
        bound = 1.0 / (C_in * K) ** 0.5                                 # PyTorch Conv1d init range
        weight = jax.random.uniform(ks[1], (C_out, C_in, K), jnp.float32, -bound, bound)
        bias = jax.random.uniform(ks[2], (C_out,), jnp.float32, -bound, bound)
        gamma = jax.random.uniform(ks[3], (C_out,), jnp.float32, 0.5, 1.5)
        beta = jax.random.uniform(ks[4], (C_out,), jnp.float32, -0.5, 0.5)

        fn = jax.jit(functools.partial(down_forward, **kwargs))
        out = jax.block_until_ready(fn(x, weight, bias, gamma, beta))
        assert out.shape == (N, C_out, L // 2), (name, out.shape)

        # Reference includes the conv bias (proving the in-kernel bias drop is exact).  The
        # kernel rounds inputs/weights to bf16 (f32 accumulate), so use a magnitude-scaled
        # tolerance rather than a fixed absolute one.
        ref = _reference(x, weight, bias, gamma, beta)
        err = float(jnp.max(jnp.abs(out - ref)))
        tol = 3e-2 + 2e-2 * float(jnp.max(jnp.abs(ref)))
        assert err < tol, f"{name}: max abs err {err:.4f} exceeds tol {tol:.4f}"
    print("KERNEL_OK")
</pallas_src>

<mosaic_0001>
module attributes {stable_mosaic.version = 11 : i64} {
  func.func @_stats_kernel(%arg0: i32, %arg1: i32, %arg2: i32, %arg3: memref<1x8x8xbf16, #tpu.memory_space<vmem>>, %arg4: memref<1x8x1xf32, #tpu.memory_space<vmem>>, %arg5: memref<2x8x8xbf16, #tpu.memory_space<vmem>>, %arg6: memref<1x1x2x8xf32, #tpu.memory_space<vmem>>) attributes {dimension_semantics = [#tpu.dimension_semantics<parallel>, #tpu.dimension_semantics<parallel>, #tpu.dimension_semantics<arbitrary>], iteration_bounds = array<i64: 2, 1, 1>, scalar_prefetch = 0 : i64, scratch_operands = 0 : i64, tpu.core_type = #tpu.core_type<tc>, window_params = [{transform_indices = @transform_0, window_bounds = array<i64: 1, 8, 8>}, {transform_indices = @transform_1, window_bounds = array<i64: 1, 8, 1>}, {pipeline_mode = #tpu.pipeline_mode<synchronous>, transform_indices = @transform_2, window_bounds = array<i64: 2, 8, 8>}, {transform_indices = @transform_3, window_bounds = array<i64: 1, 1, 2, 8>}]} {
    %c1_i32 = arith.constant 1 : i32
    %0 = arith.muli %arg1, %c1_i32 : i32
    %1 = arith.addi %0, %arg2 : i32
    %c0 = arith.constant 0 : index
    %c0_0 = arith.constant 0 : index
    %c0_1 = arith.constant 0 : index
    %2 = vector.load %arg3[%c0, %c0_0, %c0_1] : memref<1x8x8xbf16, #tpu.memory_space<vmem>>, vector<1x8x8xbf16>
    %3 = vector.shape_cast %2 : vector<1x8x8xbf16> to vector<8x8xbf16>
    %c0_2 = arith.constant 0 : index
    %c0_3 = arith.constant 0 : index
    %c0_4 = arith.constant 0 : index
    %4 = vector.load %arg5[%c0_2, %c0_3, %c0_4] : memref<2x8x8xbf16, #tpu.memory_space<vmem>>, vector<1x8x8xbf16>
    %5 = vector.shape_cast %4 : vector<1x8x8xbf16> to vector<8x8xbf16>
    %cst = arith.constant dense<0.000000e+00> : vector<8x8xf32>
    %6 = tpu.matmul %5, %3, %cst {dimension_numbers = #tpu.dot_dimension_numbers<[1], [0], [0], [1], [0, 0, 1, 1], [], []>} : vector<8x8xbf16>, vector<8x8xbf16>, vector<8x8xf32> -> vector<8x8xf32>
    %c1 = arith.constant 1 : index
    %c0_5 = arith.constant 0 : index
    %c0_6 = arith.constant 0 : index
    %7 = vector.load %arg5[%c1, %c0_5, %c0_6] : memref<2x8x8xbf16, #tpu.memory_space<vmem>>, vector<1x8x8xbf16>
    %8 = vector.shape_cast %7 : vector<1x8x8xbf16> to vector<8x8xbf16>
    %cst_7 = arith.constant dense<0.000000e+00> : vector<8x8xf32>
    %9 = tpu.matmul %8, %3, %cst_7 {dimension_numbers = #tpu.dot_dimension_numbers<[1], [0], [0], [1], [0, 0, 1, 1], [], []>} : vector<8x8xbf16>, vector<8x8xbf16>, vector<8x8xf32> -> vector<8x8xf32>
    %c0_8 = arith.constant 0 : index
    %c0_9 = arith.constant 0 : index
    %c0_10 = arith.constant 0 : index
    %10 = vector.load %arg4[%c0_8, %c0_9, %c0_10] : memref<1x8x1xf32, #tpu.memory_space<vmem>>, vector<1x8x1xf32>
    %11 = vector.shape_cast %10 : vector<1x8x1xf32> to vector<8x1xf32>
    %12 = tpu.iota {dimensions = array<i32: 1>} : vector<8x1xi32>
    %13 = vector.broadcast %1 : i32 to vector<8x1xi32>
    %14 = arith.cmpi eq, %12, %13 : vector<8x1xi32>
    %cst_11 = arith.constant 0.000000e+00 : f32
    %15 = vector.broadcast %cst_11 : f32 to vector<8x1xf32>
    %16 = arith.select %14, %11, %15 : vector<8x1xi1>, vector<8x1xf32>
    %cst_12 = arith.constant dense<0.000000e+00> : vector<8xf32>
    %17 = vector.multi_reduction <add>, %16, %cst_12 [1] : vector<8x1xf32> to vector<8xf32>
    %18 = vector.shape_cast %17 : vector<8xf32> to vector<8x1xf32>
    %19 = vector.extract_strided_slice %9 {offsets = [0, 1], sizes = [8, 7], strides = [1, 1]} : vector<8x8xf32> to vector<8x7xf32>
    %20 = vector.extract_strided_slice %9 {offsets = [0, 0], sizes = [8, 1], strides = [1, 1]} : vector<8x8xf32> to vector<8x1xf32>
    %21 = tpu.concatenate %19, %20 in 1 : vector<8x7xf32>, vector<8x1xf32> -> vector<8x8xf32>
    %22 = tpu.iota {dimensions = array<i32: 1>} : vector<8x8xi32>
    %c7_i32 = arith.constant 7 : i32
    %23 = vector.broadcast %c7_i32 : i32 to vector<8x8xi32>
    %24 = arith.cmpi eq, %22, %23 : vector<8x8xi32>
    %25 = vector.shape_cast %18 : vector<8x1xf32> to vector<8x1xf32>
    %26 = vector.broadcast %25 : vector<8x1xf32> to vector<8x8xf32>
    %27 = arith.select %24, %26, %21 : vector<8x8xi1>, vector<8x8xf32>
    %28 = arith.addf %6, %27 : vector<8x8xf32>
    %cst_13 = arith.constant dense<0.000000e+00> : vector<8xf32>
    %29 = vector.multi_reduction <add>, %28, %cst_13 [1] : vector<8x8xf32> to vector<8xf32>
    %30 = arith.mulf %28, %28 : vector<8x8xf32>
    %cst_14 = arith.constant dense<0.000000e+00> : vector<8xf32>
    %31 = vector.multi_reduction <add>, %30, %cst_14 [1] : vector<8x8xf32> to vector<8xf32>
    %32 = vector.shape_cast %29 : vector<8xf32> to vector<1x8xf32>
    %33 = vector.shape_cast %31 : vector<8xf32> to vector<1x8xf32>
    %34 = tpu.concatenate %32, %33 in 0 : vector<1x8xf32>, vector<1x8xf32> -> vector<2x8xf32>
    %c0_i32 = arith.constant 0 : i32
    %35 = arith.cmpi eq, %arg2, %c0_i32 : i32
    %36 = arith.extui %35 : i1 to i32
    %c0_i32_15 = arith.constant 0 : i32
    %37 = arith.cmpi ne, %36, %c0_i32_15 : i32
    scf.if %37 {
      %cst_24 = arith.constant 0.000000e+00 : f32
      %42 = vector.broadcast %cst_24 : f32 to vector<1x1x2x8xf32>
      %c0_25 = arith.constant 0 : index
      %c0_26 = arith.constant 0 : index
      %c0_27 = arith.constant 0 : index
      %c0_28 = arith.constant 0 : index
      %43 = vector.load %arg6[%c0_25, %c0_26, %c0_27, %c0_28] : memref<1x1x2x8xf32, #tpu.memory_space<vmem>>, vector<1x1x2x8xf32>
      tpu.vector_store %arg6[%c0_25, %c0_26, %c0_27, %c0_28], %42 {strides = array<i32>} : memref<1x1x2x8xf32, #tpu.memory_space<vmem>>, vector<1x1x2x8xf32>,
    } else {
    }
    %c0_16 = arith.constant 0 : index
    %c0_17 = arith.constant 0 : index
    %c0_18 = arith.constant 0 : index
    %c0_19 = arith.constant 0 : index
    %38 = vector.load %arg6[%c0_16, %c0_17, %c0_18, %c0_19] : memref<1x1x2x8xf32, #tpu.memory_space<vmem>>, vector<1x1x2x8xf32>
    %39 = vector.shape_cast %34 : vector<2x8xf32> to vector<1x1x2x8xf32>
    %40 = arith.addf %38, %39 : vector<1x1x2x8xf32>
    %c0_20 = arith.constant 0 : index
    %c0_21 = arith.constant 0 : index
    %c0_22 = arith.constant 0 : index
    %c0_23 = arith.constant 0 : index
    %41 = vector.load %arg6[%c0_20, %c0_21, %c0_22, %c0_23] : memref<1x1x2x8xf32, #tpu.memory_space<vmem>>, vector<1x1x2x8xf32>
    tpu.vector_store %arg6[%c0_20, %c0_21, %c0_22, %c0_23], %40 {strides = array<i32>} : memref<1x1x2x8xf32, #tpu.memory_space<vmem>>, vector<1x1x2x8xf32>,
    return
  }
  func.func @transform_0(%arg0: i32, %arg1: i32, %arg2: i32) -> (i32, i32, i32) {
    %c1_i32 = arith.constant 1 : i32
    %0 = arith.muli %arg1, %c1_i32 : i32
    %1 = arith.addi %0, %arg2 : i32
    %c0_i32 = arith.constant 0 : i32
    %c0_i32_0 = arith.constant 0 : i32
    return %arg0, %c0_i32, %1 : i32, i32, i32
  }
  func.func @transform_1(%arg0: i32, %arg1: i32, %arg2: i32) -> (i32, i32, i32) {
    %c0_i32 = arith.constant 0 : i32
    %c0_i32_0 = arith.constant 0 : i32
    %c0_i32_1 = arith.constant 0 : i32
    return %arg0, %c0_i32, %c0_i32_0 : i32, i32, i32
  }
  func.func @transform_2(%arg0: i32, %arg1: i32, %arg2: i32) -> (i32, i32, i32) {
    %c0_i32 = arith.constant 0 : i32
    %c0_i32_0 = arith.constant 0 : i32
    %c0_i32_1 = arith.constant 0 : i32
    %c0_i32_2 = arith.constant 0 : i32
    return %c0_i32, %c0_i32_0, %c0_i32_1 : i32, i32, i32
  }
  func.func @transform_3(%arg0: i32, %arg1: i32, %arg2: i32) -> (i32, i32, i32, i32) {
    %c0_i32 = arith.constant 0 : i32
    %c0_i32_0 = arith.constant 0 : i32
    %c0_i32_1 = arith.constant 0 : i32
    return %arg0, %arg1, %c0_i32, %c0_i32_0 : i32, i32, i32, i32
  }
}

module attributes {stable_mosaic.version = 11 : i64} {
  func.func @_bn_relu_recompute_kernel(%arg0: i32, %arg1: i32, %arg2: memref<1x8x8xbf16, #tpu.memory_space<vmem>>, %arg3: memref<1x8x1xf32, #tpu.memory_space<vmem>>, %arg4: memref<2x8x8xbf16, #tpu.memory_space<vmem>>, %arg5: memref<8x2xf32, #tpu.memory_space<vmem>>, %arg6: memref<1x8x8xf32, #tpu.memory_space<vmem>>) attributes {dimension_semantics = [#tpu.dimension_semantics<parallel>, #tpu.dimension_semantics<parallel>], iteration_bounds = array<i64: 2, 1>, scalar_prefetch = 0 : i64, scratch_operands = 0 : i64, tpu.core_type = #tpu.core_type<tc>, window_params = [{transform_indices = @transform_0, window_bounds = array<i64: 1, 8, 8>}, {transform_indices = @transform_1, window_bounds = array<i64: 1, 8, 1>}, {pipeline_mode = #tpu.pipeline_mode<synchronous>, transform_indices = @transform_2, window_bounds = array<i64: 2, 8, 8>}, {pipeline_mode = #tpu.pipeline_mode<synchronous>, transform_indices = @transform_3, window_bounds = array<i64: 8, 2>}, {transform_indices = @transform_4, window_bounds = array<i64: 1, 8, 8>}]} {
    %c0 = arith.constant 0 : index
    %c0_0 = arith.constant 0 : index
    %c0_1 = arith.constant 0 : index
    %0 = vector.load %arg2[%c0, %c0_0, %c0_1] : memref<1x8x8xbf16, #tpu.memory_space<vmem>>, vector<1x8x8xbf16>
    %1 = vector.shape_cast %0 : vector<1x8x8xbf16> to vector<8x8xbf16>
    %c0_2 = arith.constant 0 : index
    %c0_3 = arith.constant 0 : index
    %c0_4 = arith.constant 0 : index
    %2 = vector.load %arg4[%c0_2, %c0_3, %c0_4] : memref<2x8x8xbf16, #tpu.memory_space<vmem>>, vector<1x8x8xbf16>
    %3 = vector.shape_cast %2 : vector<1x8x8xbf16> to vector<8x8xbf16>
    %cst = arith.constant dense<0.000000e+00> : vector<8x8xf32>
    %4 = tpu.matmul %3, %1, %cst {dimension_numbers = #tpu.dot_dimension_numbers<[1], [0], [0], [1], [0, 0, 1, 1], [], []>} : vector<8x8xbf16>, vector<8x8xbf16>, vector<8x8xf32> -> vector<8x8xf32>
    %c1 = arith.constant 1 : index
    %c0_5 = arith.constant 0 : index
    %c0_6 = arith.constant 0 : index
    %5 = vector.load %arg4[%c1, %c0_5, %c0_6] : memref<2x8x8xbf16, #tpu.memory_space<vmem>>, vector<1x8x8xbf16>
    %6 = vector.shape_cast %5 : vector<1x8x8xbf16> to vector<8x8xbf16>
    %cst_7 = arith.constant dense<0.000000e+00> : vector<8x8xf32>
    %7 = tpu.matmul %6, %1, %cst_7 {dimension_numbers = #tpu.dot_dimension_numbers<[1], [0], [0], [1], [0, 0, 1, 1], [], []>} : vector<8x8xbf16>, vector<8x8xbf16>, vector<8x8xf32> -> vector<8x8xf32>
    %c0_8 = arith.constant 0 : index
    %c0_9 = arith.constant 0 : index
    %c0_10 = arith.constant 0 : index
    %8 = vector.load %arg3[%c0_8, %c0_9, %c0_10] : memref<1x8x1xf32, #tpu.memory_space<vmem>>, vector<1x8x1xf32>
    %9 = vector.shape_cast %8 : vector<1x8x1xf32> to vector<8x1xf32>
    %10 = tpu.iota {dimensions = array<i32: 1>} : vector<8x1xi32>
    %11 = vector.broadcast %arg1 : i32 to vector<8x1xi32>
    %12 = arith.cmpi eq, %10, %11 : vector<8x1xi32>
    %cst_11 = arith.constant 0.000000e+00 : f32
    %13 = vector.broadcast %cst_11 : f32 to vector<8x1xf32>
    %14 = arith.select %12, %9, %13 : vector<8x1xi1>, vector<8x1xf32>
    %cst_12 = arith.constant dense<0.000000e+00> : vector<8xf32>
    %15 = vector.multi_reduction <add>, %14, %cst_12 [1] : vector<8x1xf32> to vector<8xf32>
    %16 = vector.shape_cast %15 : vector<8xf32> to vector<8x1xf32>
    %17 = vector.extract_strided_slice %7 {offsets = [0, 1], sizes = [8, 7], strides = [1, 1]} : vector<8x8xf32> to vector<8x7xf32>
    %18 = vector.extract_strided_slice %7 {offsets = [0, 0], sizes = [8, 1], strides = [1, 1]} : vector<8x8xf32> to vector<8x1xf32>
    %19 = tpu.concatenate %17, %18 in 1 : vector<8x7xf32>, vector<8x1xf32> -> vector<8x8xf32>
    %20 = tpu.iota {dimensions = array<i32: 1>} : vector<8x8xi32>
    %c7_i32 = arith.constant 7 : i32
    %21 = vector.broadcast %c7_i32 : i32 to vector<8x8xi32>
    %22 = arith.cmpi eq, %20, %21 : vector<8x8xi32>
    %23 = vector.shape_cast %16 : vector<8x1xf32> to vector<8x1xf32>
    %24 = vector.broadcast %23 : vector<8x1xf32> to vector<8x8xf32>
    %25 = arith.select %22, %24, %19 : vector<8x8xi1>, vector<8x8xf32>
    %26 = arith.addf %4, %25 : vector<8x8xf32>
    %c0_13 = arith.constant 0 : index
    %c0_14 = arith.constant 0 : index
    %27 = vector.load %arg5[%c0_13, %c0_14] : memref<8x2xf32, #tpu.memory_space<vmem>>, vector<8x1xf32>
    %28 = vector.broadcast %27 : vector<8x1xf32> to vector<8x8xf32>
    %29 = arith.mulf %26, %28 : vector<8x8xf32>
    %c0_15 = arith.constant 0 : index
    %c1_16 = arith.constant 1 : index
    %30 = vector.load %arg5[%c0_15, %c1_16] : memref<8x2xf32, #tpu.memory_space<vmem>>, vector<8x1xf32>
    %31 = vector.broadcast %30 : vector<8x1xf32> to vector<8x8xf32>
    %32 = arith.addf %29, %31 : vector<8x8xf32>
    %cst_17 = arith.constant 0.000000e+00 : f32
    %33 = vector.broadcast %cst_17 : f32 to vector<8x8xf32>
    %34 = arith.maximumf %32, %33 : vector<8x8xf32>
    %c0_18 = arith.constant 0 : index
    %c0_19 = arith.constant 0 : index
    %c0_20 = arith.constant 0 : index
    %35 = vector.load %arg6[%c0_18, %c0_19, %c0_20] : memref<1x8x8xf32, #tpu.memory_space<vmem>>, vector<1x8x8xf32>
    %36 = vector.shape_cast %35 : vector<1x8x8xf32> to vector<8x8xf32>
    %37 = vector.shape_cast %34 : vector<8x8xf32> to vector<1x8x8xf32>
    tpu.vector_store %arg6[%c0_18, %c0_19, %c0_20], %37 {strides = array<i32>} : memref<1x8x8xf32, #tpu.memory_space<vmem>>, vector<1x8x8xf32>,
    return
  }
  func.func @transform_0(%arg0: i32, %arg1: i32) -> (i32, i32, i32) {
    %c0_i32 = arith.constant 0 : i32
    %c0_i32_0 = arith.constant 0 : i32
    return %arg0, %c0_i32, %arg1 : i32, i32, i32
  }
  func.func @transform_1(%arg0: i32, %arg1: i32) -> (i32, i32, i32) {
    %c0_i32 = arith.constant 0 : i32
    %c0_i32_0 = arith.constant 0 : i32
    %c0_i32_1 = arith.constant 0 : i32
    return %arg0, %c0_i32, %c0_i32_0 : i32, i32, i32
  }
  func.func @transform_2(%arg0: i32, %arg1: i32) -> (i32, i32, i32) {
    %c0_i32 = arith.constant 0 : i32
    %c0_i32_0 = arith.constant 0 : i32
    %c0_i32_1 = arith.constant 0 : i32
    %c0_i32_2 = arith.constant 0 : i32
    return %c0_i32, %c0_i32_0, %c0_i32_1 : i32, i32, i32
  }
  func.func @transform_3(%arg0: i32, %arg1: i32) -> (i32, i32) {
    %c0_i32 = arith.constant 0 : i32
    %c0_i32_0 = arith.constant 0 : i32
    %c0_i32_1 = arith.constant 0 : i32
    return %c0_i32, %c0_i32_0 : i32, i32
  }
  func.func @transform_4(%arg0: i32, %arg1: i32) -> (i32, i32, i32) {
    %c0_i32 = arith.constant 0 : i32
    %c0_i32_0 = arith.constant 0 : i32
    return %arg0, %c0_i32, %arg1 : i32, i32, i32
  }
}

</mosaic_0001>

<llo_original>
// kernel: down_forward.2
$region0: #{down_forward.2}
  #allocation0 [shape = 'u32[]', space=smem, size = 0x4, offset = 0x4, fixed_abs, tag = 'smem constant byte address 0x4 - core index']
  #allocation1 [shape = 'u32[144,128]{1,0:T(1,128)}', space=vmem, size = 0x12000, scoped, tag = 'internal scratch']
  %s0 = inlined_call_operand.vmem [shape: bf16[2,8,8], index: 0, kind: input, shape index: {}]
  %s1 = inlined_call_operand.vmem [shape: f32[2,8,1], index: 1, kind: input, shape index: {}]
  %s2 = inlined_call_operand.vmem [shape: bf16[2,8,8], index: 2, kind: input, shape index: {}]
  %s3 = inlined_call_operand.vmem [shape: f32[2,1,2,8], index: 3, kind: output, shape index: {}]
  %s4 = sld [smem:[#allocation0]]
  $region49: #{down_forward.2} parent=0
    _
  %s6 = ssub.s32 1, %s4
  %s7 = scalar_select 0, %s6, %s4
  loop: start=0, step=1, limit=4
  $region2: #{down_forward.2} parent=0 // loop_pre_header
    _
  $region3: #{down_forward.2} parent=0 // loop_header
    %s9 = sphi 0, %s13
    %p10 = scmp.ge.s32.totalorder %s9, 4
    %s16 = sphi 0, %s35
    %s17 = sphi 0, %s31
    %s18 = sphi 0, %s27
    %s19 = sphi 0, %s16
    %s20 = sphi 0, %s17
    %s21 = sphi 0, %s18
    %s22 = sphi 0, %s19
    %s23 = sphi 0, %s20
    %s24 = sphi 0, %s21
    %s42 = sphi 0, %s44
    %s45 = sphi 0, %s42
    %s46 = sphi 0, %s45
    %s62 = sphi 0, %s46
    %s68 = sphi 0, %s70
    %s71 = sphi 0, %s68
    %s72 = sphi 0, %s71
    %s88 = sphi 0, %s72
    %s92 = sphi 0, %s92
    %s94 = sphi 0, %s92
    %s95 = sphi 0, %s94
    %s109 = sphi 0, %s95
    %s117 = sphi 0, %s119
    %s120 = sphi 0, %s117
    %s121 = sphi 0, %s120
    %s137 = sphi 0, %s121
  $region4: #{down_forward.2} parent=0 // loop_header_branch
    %12 = sbr.rel (%p10) target = $region8
  $region5: #{down_forward.2} parent=0 // loop_body
    %s14 = ssub.s32 %s9, 1
    %s15 = ssub.s32 %s9, 2
    %s25 = sadd.s32 1, %s18
    %p26 = scmp.ge.s32.totalorder %s25, 1
    %s27 = scalar_select %p26, 0, %s25
    %s28 = sadd.s32 1, %s17
    %s29 = scalar_select %p26, %s28, %s17
    %p30 = scmp.ge.s32.totalorder %s29, 1
    %s31 = scalar_select %p30, 0, %s29
    %s32 = sadd.s32 1, %s16
    %s33 = scalar_select %p30, %s32, %s16
    %p34 = scmp.ge.s32.totalorder %s33, 2
    %s35 = scalar_select %p34, 0, %s33
    %s36 = sadd.s32 %s17, %s18
    %s37 = sadd.s32 %s31, %s27
    %s38 = ssub.s32 %s16, %s35
    %s39 = ssub.s32 %s36, %s37
    %s40 = sor.u32 %s38, %s39
    %p41 = scmp.eq.s32.totalorder %s40, 0
    %s43 = sadd.s32 %s42, 1
    %s44 = scalar_select %p41, %s42, %s43
    %p47 = pneg %p41
    %p48 = scmp.eq.s32.totalorder %s9, 1
    %p49 = por %p47, %p48
    %p50 = scmp.ne.s32.totalorder %s42, %s45
    %p51 = scmp.eq.s32.totalorder %s9, 0
    %p52 = por %p50, %p51
    %p53 = scmp.ne.s32.totalorder %s42, %s45
    %p54 = scmp.eq.s32.totalorder %s14, 1
    %p55 = por %p53, %p54
    %p56 = scmp.ne.s32.totalorder %s45, %s46
    %p57 = scmp.eq.s32.totalorder %s14, 0
    %p58 = por %p56, %p57
    %p59 = scmp.ne.s32.totalorder %s45, %s46
    %p60 = scmp.eq.s32.totalorder %s15, 1
    %p61 = por %p59, %p60
    %p63 = scmp.ne.s32.totalorder %s46, %s62
    %p64 = scmp.eq.s32.totalorder %s15, 0
    %p65 = por %p63, %p64
    %s66 = ssub.s32 %s16, %s35
    %p67 = scmp.eq.s32.totalorder %s66, 0
    %s69 = sadd.s32 %s68, 1
    %s70 = scalar_select %p67, %s68, %s69
    %p73 = pneg %p67
    %p74 = scmp.eq.s32.totalorder %s9, 1
    %p75 = por %p73, %p74
    %p76 = scmp.ne.s32.totalorder %s68, %s71
    %p77 = scmp.eq.s32.totalorder %s9, 0
    %p78 = por %p76, %p77
    %p79 = scmp.ne.s32.totalorder %s68, %s71
    %p80 = scmp.eq.s32.totalorder %s14, 1
    %p81 = por %p79, %p80
    %p82 = scmp.ne.s32.totalorder %s71, %s72
    %p83 = scmp.eq.s32.totalorder %s14, 0
    %p84 = por %p82, %p83
    %p85 = scmp.ne.s32.totalorder %s71, %s72
    %p86 = scmp.eq.s32.totalorder %s15, 1
    %p87 = por %p85, %p86
    %p89 = scmp.ne.s32.totalorder %s72, %s88
    %p90 = scmp.eq.s32.totalorder %s15, 0
    %p91 = por %p89, %p90
    %s93 = sadd.s32 %s92, 1
    %p96 = scmp.eq.s32.totalorder %s9, 1
    %p97 = scmp.ne.s32.totalorder %s92, %s94
    %p98 = scmp.eq.s32.totalorder %s9, 0
    %p99 = por %p97, %p98
    %p100 = scmp.ne.s32.totalorder %s92, %s94
    %p101 = scmp.eq.s32.totalorder %s14, 1
    %p102 = por %p100, %p101
    %p103 = scmp.ne.s32.totalorder %s94, %s95
    %p104 = scmp.eq.s32.totalorder %s14, 0
    %p105 = por %p103, %p104
    %p106 = scmp.ne.s32.totalorder %s94, %s95
    %p107 = scmp.eq.s32.totalorder %s15, 1
    %p108 = por %p106, %p107
    %p110 = scmp.ne.s32.totalorder %s95, %s109
    %p111 = scmp.eq.s32.totalorder %s15, 0
    %p112 = por %p110, %p111
    %s113 = ssub.s32 %s16, %s35
    %s114 = ssub.s32 %s17, %s31
    %s115 = sor.u32 %s113, %s114
    %p116 = scmp.eq.s32.totalorder %s115, 0
    %s118 = sadd.s32 %s117, 1
    %s119 = scalar_select %p116, %s117, %s118
    %p122 = pneg %p116
    %p123 = scmp.eq.s32.totalorder %s9, 1
    %p124 = por %p122, %p123
    %p125 = scmp.ne.s32.totalorder %s117, %s120
    %p126 = scmp.eq.s32.totalorder %s9, 0
    %p127 = por %p125, %p126
    %p128 = scmp.ne.s32.totalorder %s117, %s120
    %p129 = scmp.eq.s32.totalorder %s14, 1
    %p130 = por %p128, %p129
    %p131 = scmp.ne.s32.totalorder %s120, %s121
    %p132 = scmp.eq.s32.totalorder %s14, 0
    %p133 = por %p131, %p132
    %p134 = scmp.ne.s32.totalorder %s120, %s121
    %p135 = scmp.eq.s32.totalorder %s15, 1
    %p136 = por %p134, %p135
    %p138 = scmp.ne.s32.totalorder %s121, %s137
    %p139 = scmp.eq.s32.totalorder %s15, 0
    %p140 = por %p138, %p139
    %p141 = scmp.le.s32.totalorder 1, %s9
    %p142 = scmp.lt.s32.totalorder %s9, 3
    %p143 = pnand %p141, %p142
    %p144 = pneg %p143
    // Predicated region
    $region9: #{down_forward.2} parent=5 // pred_check
      _
    $region10: #{down_forward.2} parent=5 // pred_check_branch
      %146 = sbr.rel (%p143) target = $region12
    $region11: #{down_forward.2} parent=5 // pred_region
      %s147 = ssub.s32 %s9, 1
      // Predicated region
      $region13: #{down_forward.2} parent=11 // pred_check
        %p148 = pneg %p105
      $region14: #{down_forward.2} parent=11 // pred_check_branch
        %150 = sbr.rel (%p148) target = $region16
      $region15: #{down_forward.2} parent=11 // pred_region
        _
      $region16: #{down_forward.2} parent=11 // pred_fallthru
        _
    $region12: #{down_forward.2} parent=5 // pred_fallthru
      _
    %p151 = scmp.lt.s32.totalorder %s9, 2
    // Predicated region
    $region17: #{down_forward.2} parent=5 // pred_check
      %p152 = pneg %p151
    $region18: #{down_forward.2} parent=5 // pred_check_branch
      %154 = sbr.rel (%p152) target = $region20
    $region19: #{down_forward.2} parent=5 // pred_region
      // Predicated region
      $region21: #{down_forward.2} parent=19 // pred_check
        %p155 = pneg %p52
      $region22: #{down_forward.2} parent=19 // pred_check_branch
        %157 = sbr.rel (%p155) target = $region24
      $region23: #{down_forward.2} parent=19 // pred_region
        %s158 = sadd.s32 %s17, %s18
        %p159 = scmp.lt.s32.totalorder %s16, 1
        %s160 = scalar_select %p159, %s16, 1
        %p161 = scmp.lt.s32.totalorder %s158, 0
        %s162 = scalar_select %p161, %s158, 0
        %s163 = sadd.s32 %s162, %s160
        %s164 = smul.addr %s163, 4
        %s165 = scalar_lea.vmem %s0, %s164
        %s166 = sadd.s32 %s17, %s18
      $region24: #{down_forward.2} parent=19 // pred_fallthru
        _
      // Predicated region
      $region25: #{down_forward.2} parent=19 // pred_check
        %p167 = pneg %p78
      $region26: #{down_forward.2} parent=19 // pred_check_branch
        %169 = sbr.rel (%p167) target = $region28
      $region27: #{down_forward.2} parent=19 // pred_region
        %p170 = scmp.lt.s32.totalorder %s16, 1
        %s171 = scalar_select %p170, %s16, 1
        %s172 = smul.addr %s171, 8
        %s173 = scalar_lea.vmem %s1, %s172
      $region28: #{down_forward.2} parent=19 // pred_fallthru
        _
    $region20: #{down_forward.2} parent=5 // pred_fallthru
      _
    %p174 = scmp.le.s32.totalorder 1, %s9
    %p175 = scmp.lt.s32.totalorder %s9, 3
    %p176 = pnand %p174, %p175
    %p177 = pneg %p176
    // Predicated region
    $region29: #{down_forward.2} parent=5 // pred_check
      _
    $region30: #{down_forward.2} parent=5 // pred_check_branch
      %179 = sbr.rel (%p176) target = $region32
    $region31: #{down_forward.2} parent=5 // pred_region
      %s180 = ssub.s32 %s9, 1
      %s181 = sadd.s32 %s20, %s21
      %p182 = scmp.lt.s32.totalorder %s19, 1
      %s183 = scalar_select %p182, %s19, 1
      %p184 = scmp.lt.s32.totalorder %s181, 0
      %s185 = scalar_select %p184, %s181, 0
      %s186 = sadd.s32 %s185, %s183
      %s187 = smul.addr %s186, 4
      %s188 = scalar_lea.vmem %s0, %s187
      %p189 = pneg %p58
      %p190 = pneg %p55
      %p191 = scmp.lt.s32.totalorder %s19, 1
      %s192 = scalar_select %p191, %s19, 1
      %s193 = smul.addr %s192, 8
      %s194 = scalar_lea.vmem %s1, %s193
      %p195 = pneg %p84
      %p196 = pneg %p81
      %p197 = pneg %p105
      %p198 = pneg %p102
      %p199 = pneg %p133
      %p200 = pneg %p130
      %p201 = scmp.lt.s32.totalorder %s19, 1
      %s202 = scalar_select %p201, %s19, 1
      %p203 = scmp.lt.s32.totalorder %s20, 0
      %s204 = scalar_select %p203, %s20, 0
      %s205 = sadd.s32 %s204, %s202
      %s206 = smul.addr %s205, 2
      %s207 = scalar_lea.vmem %s3, %s206
      %s208 = sadd.s32 %s20, %s21
      %p209 = scmp.lt.s32.totalorder %s19, 1
      %s210 = scalar_select %p209, %s19, 1
      %p211 = scmp.lt.s32.totalorder %s208, 0
      %s212 = scalar_select %p211, %s208, 0
      %s213 = sadd.s32 %s212, %s210
      %s214 = smul.addr %s213, 4
      %s215 = scalar_lea.vmem %s0, %s214
      %s216 = sadd.s32 %s20, %s21
      %p217 = scmp.lt.s32.totalorder %s19, 1
      %s218 = scalar_select %p217, %s19, 1
      %s219 = smul.addr %s218, 8
      %s220 = scalar_lea.vmem %s1, %s219
      %p221 = scmp.lt.s32.totalorder %s19, 1
      %s222 = scalar_select %p221, %s19, 1
      %p223 = scmp.lt.s32.totalorder %s20, 0
      %s224 = scalar_select %p223, %s20, 0
      %s225 = sadd.s32 %s224, %s222
      %s226 = smul.addr %s225, 2
      %s227 = scalar_lea.vmem %s3, %s226
      %s229 = sadd.s32 %s20, %s21
      %v230 = vld [vmem:[%s215] sm:$0xf]
      %v231 = vld [vmem:[%s2] sm:$0xf]
      %s232 = scalar_lea.vmem %s2, 4
      %v233 = vld [vmem:[%s232] sm:$0xf]
      %vm234 = vcmask 64512
      %v236 = vsel %vm234, %v233, 0
      %vm238 = vcmask 1043456
      %v240 = vsel %vm238, %v230, 0
      %242 = vmatprep.subr.bf16.mxu0 0
      %243 = vmatpush1.bf16.msra.mxu0 %v240
      %244 = vmatprep.subr.bf16.mxu0 0
      %245 = vmatpush1.bf16.msra.mxu0 0
      %246 = vmatprep.subr.bf16.mxu0 0
      %247 = vmatpush1.bf16.msra.mxu0 0
      %248 = vmatprep.subr.bf16.mxu0 0
      %249 = vmatpush1.bf16.msra.mxu0 0
      %250 = vmatprep.subr.bf16.mxu0 0
      %251 = vmatpush1.bf16.msra.mxu0 0
      %252 = vmatprep.subr.bf16.mxu0 0
      %253 = vmatpush1.bf16.msra.mxu0 0
      %254 = vmatprep.subr.bf16.mxu0 0
      %255 = vmatpush1.bf16.msra.mxu0 0
      %256 = vmatprep.subr.bf16.mxu0 0
      %257 = vmatpush1.bf16.msra.mxu0 0
      %258 = vmatprep.subr.bf16.mxu0 0
      %259 = vmatpush1.bf16.msra.mxu0 0
      %260 = vmatprep.subr.bf16.mxu0 0
      %261 = vmatpush1.bf16.msra.mxu0 0
      %262 = vmatprep.subr.bf16.mxu0 0
      %263 = vmatpush1.bf16.msra.mxu0 0
      %264 = vmatprep.subr.bf16.mxu0 0
      %265 = vmatpush1.bf16.msra.mxu0 0
      %266 = vmatprep.subr.bf16.mxu0 0
      %267 = vmatpush1.bf16.msra.mxu0 0
      %268 = vmatprep.subr.bf16.mxu0 0
      %269 = vmatpush1.bf16.msra.mxu0 0
      %270 = vmatprep.subr.bf16.mxu0 0
      %271 = vmatpush1.bf16.msra.mxu0 0
      %272 = vmatprep.subr.bf16.mxu0 0
      %273 = vmatpush1.bf16.msra.mxu0 0
      %274 = vmatprep.mubr.bf16.mxu0 0
      %275 = vmatmul.mubr.bf16.gmra.mrb[0].mxu0 %v236
      %v276 = vpop.f32.mrb[0].mxu0
      %v277 = vadd.f32 0.0, %v276
      %v278 = vpop.f32.mrb[0].mxu0
      %v279 = vpop.f32.mrb[0].mxu0
      %v280 = vpop.f32.mrb[0].mxu0
      %281 = vdwg.mxu0
      %v282 = vld [vmem:[%s220] sm:$0xff]
      %v283 = vlaneseq
      %v284 = vand.u32 %v283, 127
      %v285 = vstv %s229
      %vm286 = vcmp.eq.s32.totalorder %v284, %v285
      %v287 = vsel %vm286, %v282, 0.0
      %v288 = vadd.f32 %v287, 0.0
      %290 = vrot.lane.b32.xlu0 %v277, 127
      %v291 = vpop.permute.xlu0 %290
      %293 = vrot.lane.b32.xlu0 %v277, 7
      %v294 = vpop.permute.xlu0 %293
      %vm296 = vcmask 56320
      %v297 = vsel %vm296, %v291, %v294
      %vm298 = vcmp.eq.s32.totalorder %v284, 7
      %300 = vset.pattern.permute.xlu0 0
      %301 = vperm.xlu0 %300, %v288
      %v302 = vpop.permute.xlu0 %301
      %v304 = vsel %vm298, %v302, %v297
      %v306 = vsel %vm234, %v231, 0
      %308 = vmatprep.subr.bf16.mxu0 0
      %309 = vmatpush1.bf16.msra.mxu0 %v240
      %310 = vmatprep.subr.bf16.mxu0 0
      %311 = vmatpush1.bf16.msra.mxu0 0
      %312 = vmatprep.subr.bf16.mxu0 0
      %313 = vmatpush1.bf16.msra.mxu0 0
      %314 = vmatprep.subr.bf16.mxu0 0
      %315 = vmatpush1.bf16.msra.mxu0 0
      %316 = vmatprep.subr.bf16.mxu0 0
      %317 = vmatpush1.bf16.msra.mxu0 0
      %318 = vmatprep.subr.bf16.mxu0 0
      %319 = vmatpush1.bf16.msra.mxu0 0
      %320 = vmatprep.subr.bf16.mxu0 0
      %321 = vmatpush1.bf16.msra.mxu0 0
      %322 = vmatprep.subr.bf16.mxu0 0
      %323 = vmatpush1.bf16.msra.mxu0 0
      %324 = vmatprep.subr.bf16.mxu0 0
      %325 = vmatpush1.bf16.msra.mxu0 0
      %326 = vmatprep.subr.bf16.mxu0 0
      %327 = vmatpush1.bf16.msra.mxu0 0
      %328 = vmatprep.subr.bf16.mxu0 0
      %329 = vmatpush1.bf16.msra.mxu0 0
      %330 = vmatprep.subr.bf16.mxu0 0
      %331 = vmatpush1.bf16.msra.mxu0 0
      %332 = vmatprep.subr.bf16.mxu0 0
      %333 = vmatpush1.bf16.msra.mxu0 0
      %334 = vmatprep.subr.bf16.mxu0 0
      %335 = vmatpush1.bf16.msra.mxu0 0
      %336 = vmatprep.subr.bf16.mxu0 0
      %337 = vmatpush1.bf16.msra.mxu0 0
      %338 = vmatprep.subr.bf16.mxu0 0
      %339 = vmatpush1.bf16.msra.mxu0 0
      %340 = vmatprep.mubr.bf16.mxu0 0
      %341 = vmatmul.mubr.bf16.gmra.mrb[0].mxu0 %v306
      %v342 = vpop.f32.mrb[0].mxu0
      %v343 = vadd.f32 %v304, %v342
      %v344 = vpop.f32.mrb[0].mxu0
      %v345 = vpop.f32.mrb[0].mxu0
      %v346 = vpop.f32.mrb[0].mxu0
      %347 = vdwg.mxu0
      %v348 = vsel %vm234, %v343, 0.0
      %349 = vadd.xlane.f32.xlu0 %v348
      %v350 = vpop.xlane.xlu0 %349
      %v351 = vmul.f32 %v343, %v343
      %v352 = vsel %vm234, %v351, 0.0
      %353 = vadd.xlane.f32.xlu0 %v352
      %v354 = vpop.xlane.xlu0 %353
      %v356 = vlaneseq
      %v357 = vshrl.u32 %v356, 7
      %v358 = vsub.s32 %v284, %v357
      %v359 = vrot.slane %v350, %v358
      %v362 = vlaneseq
      %v363 = vshrl.u32 %v362, 7
      %v364 = vsub.s32 %v284, %v363
      %v365 = vrot.slane %v354, %v364
      %vm367 = vcmask 1040384
      %v368 = vsel %vm367, %v359, %v365
      %p369 = scmp.eq.s32.totalorder %s21, 0
      // Predicated region
      $region33: #{down_forward.2} parent=31 // pred_check
        %p370 = pneg %p369
      $region34: #{down_forward.2} parent=31 // pred_check_branch
        %372 = sbr.rel (%p370) target = $region36
      $region35: #{down_forward.2} parent=31 // pred_region
        %vm373 = vcmask 58368
        %374 = vst.msk [vmem:[%s227] sm:$0x3] %vm373, 0.0
      $region36: #{down_forward.2} parent=31 // pred_fallthru
        _
      %v375 = vld [vmem:[%s227] sm:$0x3]
      %v376 = vadd.f32 %v375, %v368
      %vm377 = vcmask 58368
      %378 = vst.msk [vmem:[%s227] sm:$0x3] %vm377, %v376
      %p379 = scmp.lt.s32.totalorder %s19, 1
      %s380 = scalar_select %p379, %s19, 1
      %p381 = scmp.lt.s32.totalorder %s20, 0
      %s382 = scalar_select %p381, %s20, 0
      %s383 = sadd.s32 %s382, %s380
      %s384 = smul.addr %s383, 2
      %s385 = scalar_lea.vmem %s3, %s384
      // Predicated region
      $region37: #{down_forward.2} parent=31 // pred_check
        %p386 = pneg %p130
      $region38: #{down_forward.2} parent=31 // pred_check_branch
        %388 = sbr.rel (%p386) target = $region40
      $region39: #{down_forward.2} parent=31 // pred_region
        _
      $region40: #{down_forward.2} parent=31 // pred_fallthru
        _
    $region32: #{down_forward.2} parent=5 // pred_fallthru
      _
    %p389 = scmp.le.s32.totalorder 2, %s9
    // Predicated region
    $region41: #{down_forward.2} parent=5 // pred_check
      %p390 = pneg %p389
    $region42: #{down_forward.2} parent=5 // pred_check_branch
      %392 = sbr.rel (%p390) target = $region44
    $region43: #{down_forward.2} parent=5 // pred_region
      %s393 = ssub.s32 %s9, 2
      // Predicated region
      $region45: #{down_forward.2} parent=43 // pred_check
        %p394 = pneg %p136
      $region46: #{down_forward.2} parent=43 // pred_check_branch
        %396 = sbr.rel (%p394) target = $region48
      $region47: #{down_forward.2} parent=43 // pred_region
        %p397 = scmp.lt.s32.totalorder %s22, 1
        %s398 = scalar_select %p397, %s22, 1
        %p399 = scmp.lt.s32.totalorder %s23, 0
        %s400 = scalar_select %p399, %s23, 0
        %s401 = sadd.s32 %s400, %s398
        %s402 = smul.addr %s401, 2
        %s403 = scalar_lea.vmem %s3, %s402
      $region48: #{down_forward.2} parent=43 // pred_fallthru
        _
    $region44: #{down_forward.2} parent=5 // pred_fallthru
      _
  $region6: #{down_forward.2} parent=0 // loop_footer
    %s13 = sadd.s32 1, %s9
  $region7: #{down_forward.2} parent=0 // loop_footer_branch
    %8 = sbr.rel target = $region3
  $region8: #{down_forward.2} parent=0 // loop_exit
    _

// kernel: down_forward.3
$region0: #{down_forward.3}
  #allocation0 [shape = 'u32[]', space=smem, size = 0x4, offset = 0x4, fixed_abs, tag = 'smem constant byte address 0x4 - core index']
  #allocation1 [shape = 'u32[144,128]{1,0:T(1,128)}', space=vmem, size = 0x12000, scoped, tag = 'internal scratch']
  %s0 = inlined_call_operand.vmem [shape: bf16[2,8,8], index: 0, kind: input, shape index: {}]
  %s1 = inlined_call_operand.vmem [shape: f32[2,8,1], index: 1, kind: input, shape index: {}]
  %s2 = inlined_call_operand.vmem [shape: bf16[2,8,8], index: 2, kind: input, shape index: {}]
  %s3 = inlined_call_operand.vmem [shape: f32[8,2], index: 3, kind: input, shape index: {}]
  %s4 = inlined_call_operand.hbm [shape: f32[2,8,8], index: 4, kind: output, shape index: {}]
  %s5 = sld [smem:[#allocation0]]
  $region49: #{down_forward.3} parent=0
    _
  %s7 = ssub.s32 1, %s5
  %s8 = scalar_select 0, %s7, %s5
  $region1: #{down_forward.3} parent=0
    #allocation2 [shape = 'u8[8192]{0}', space=vmem, size = 0x2000, scoped, tag = 'output window, operand 0']
    #allocation3 [shape = 's32[2]{0}', space=sflag, size = 0x8, scoped, tag = 'scoped memory for down_forward.3']
    %9 = vsyncpa [#allocation3], 0
    %s10 = scalar_lea.sflag [#allocation3], 1
    %11 = vsyncpa %s10, 0
    loop: start=0, step=1, limit=4
    $region2: #{down_forward.3} parent=1 // loop_pre_header
      _
    $region3: #{down_forward.3} parent=1 // loop_header
      %s13 = sphi 0, %s17
      %p14 = scmp.ge.s32.totalorder %s13, 4
      %s20 = sphi 0, %s32
      %s21 = sphi 0, %s28
      %s22 = sphi 0, %s20
      %s23 = sphi 0, %s21
      %s24 = sphi 0, %s22
      %s25 = sphi 0, %s23
      %s37 = sphi 0, %s39
      %s40 = sphi 0, %s37
      %s41 = sphi 0, %s40
      %s57 = sphi 0, %s41
      %s63 = sphi 0, %s65
      %s66 = sphi 0, %s63
      %s67 = sphi 0, %s66
      %s83 = sphi 0, %s67
      %s87 = sphi 0, %s87
      %s89 = sphi 0, %s87
      %s90 = sphi 0, %s89
      %s104 = sphi 0, %s90
      %s108 = sphi 0, %s108
      %s110 = sphi 0, %s108
      %s111 = sphi 0, %s110
      %s125 = sphi 0, %s111
      %s133 = sphi 0, %s135
      %s136 = sphi 0, %s133
      %s137 = sphi 0, %s136
      %s153 = sphi 0, %s137
    $region4: #{down_forward.3} parent=1 // loop_header_branch
      %16 = sbr.rel (%p14) target = $region8
    $region5: #{down_forward.3} parent=1 // loop_body
      %s18 = ssub.s32 %s13, 1
      %s19 = ssub.s32 %s13, 2
      %s26 = sadd.s32 1, %s21
      %p27 = scmp.ge.s32.totalorder %s26, 1
      %s28 = scalar_select %p27, 0, %s26
      %s29 = sadd.s32 1, %s20
      %s30 = scalar_select %p27, %s29, %s20
      %p31 = scmp.ge.s32.totalorder %s30, 2
      %s32 = scalar_select %p31, 0, %s30
      %s33 = ssub.s32 %s20, %s32
      %s34 = ssub.s32 %s21, %s28
      %s35 = sor.u32 %s33, %s34
      %p36 = scmp.eq.s32.totalorder %s35, 0
      %s38 = sadd.s32 %s37, 1
      %s39 = scalar_select %p36, %s37, %s38
      %p42 = pneg %p36
      %p43 = scmp.eq.s32.totalorder %s13, 1
      %p44 = por %p42, %p43
      %p45 = scmp.ne.s32.totalorder %s37, %s40
      %p46 = scmp.eq.s32.totalorder %s13, 0
      %p47 = por %p45, %p46
      %p48 = scmp.ne.s32.totalorder %s37, %s40
      %p49 = scmp.eq.s32.totalorder %s18, 1
      %p50 = por %p48, %p49
      %p51 = scmp.ne.s32.totalorder %s40, %s41
      %p52 = scmp.eq.s32.totalorder %s18, 0
      %p53 = por %p51, %p52
      %p54 = scmp.ne.s32.totalorder %s40, %s41
      %p55 = scmp.eq.s32.totalorder %s19, 1
      %p56 = por %p54, %p55
      %p58 = scmp.ne.s32.totalorder %s41, %s57
      %p59 = scmp.eq.s32.totalorder %s19, 0
      %p60 = por %p58, %p59
      %s61 = ssub.s32 %s20, %s32
      %p62 = scmp.eq.s32.totalorder %s61, 0
      %s64 = sadd.s32 %s63, 1
      %s65 = scalar_select %p62, %s63, %s64
      %p68 = pneg %p62
      %p69 = scmp.eq.s32.totalorder %s13, 1
      %p70 = por %p68, %p69
      %p71 = scmp.ne.s32.totalorder %s63, %s66
      %p72 = scmp.eq.s32.totalorder %s13, 0
      %p73 = por %p71, %p72
      %p74 = scmp.ne.s32.totalorder %s63, %s66
      %p75 = scmp.eq.s32.totalorder %s18, 1
      %p76 = por %p74, %p75
      %p77 = scmp.ne.s32.totalorder %s66, %s67
      %p78 = scmp.eq.s32.totalorder %s18, 0
      %p79 = por %p77, %p78
      %p80 = scmp.ne.s32.totalorder %s66, %s67
      %p81 = scmp.eq.s32.totalorder %s19, 1
      %p82 = por %p80, %p81
      %p84 = scmp.ne.s32.totalorder %s67, %s83
      %p85 = scmp.eq.s32.totalorder %s19, 0
      %p86 = por %p84, %p85
      %s88 = sadd.s32 %s87, 1
      %p91 = scmp.eq.s32.totalorder %s13, 1
      %p92 = scmp.ne.s32.totalorder %s87, %s89
      %p93 = scmp.eq.s32.totalorder %s13, 0
      %p94 = por %p92, %p93
      %p95 = scmp.ne.s32.totalorder %s87, %s89
      %p96 = scmp.eq.s32.totalorder %s18, 1
      %p97 = por %p95, %p96
      %p98 = scmp.ne.s32.totalorder %s89, %s90
      %p99 = scmp.eq.s32.totalorder %s18, 0
      %p100 = por %p98, %p99
      %p101 = scmp.ne.s32.totalorder %s89, %s90
      %p102 = scmp.eq.s32.totalorder %s19, 1
      %p103 = por %p101, %p102
      %p105 = scmp.ne.s32.totalorder %s90, %s104
      %p106 = scmp.eq.s32.totalorder %s19, 0
      %p107 = por %p105, %p106
      %s109 = sadd.s32 %s108, 1
      %p112 = scmp.eq.s32.totalorder %s13, 1
      %p113 = scmp.ne.s32.totalorder %s108, %s110
      %p114 = scmp.eq.s32.totalorder %s13, 0
      %p115 = por %p113, %p114
      %p116 = scmp.ne.s32.totalorder %s108, %s110
      %p117 = scmp.eq.s32.totalorder %s18, 1
      %p118 = por %p116, %p117
      %p119 = scmp.ne.s32.totalorder %s110, %s111
      %p120 = scmp.eq.s32.totalorder %s18, 0
      %p121 = por %p119, %p120
      %p122 = scmp.ne.s32.totalorder %s110, %s111
      %p123 = scmp.eq.s32.totalorder %s19, 1
      %p124 = por %p122, %p123
      %p126 = scmp.ne.s32.totalorder %s111, %s125
      %p127 = scmp.eq.s32.totalorder %s19, 0
      %p128 = por %p126, %p127
      %s129 = ssub.s32 %s20, %s32
      %s130 = ssub.s32 %s21, %s28
      %s131 = sor.u32 %s129, %s130
      %p132 = scmp.eq.s32.totalorder %s131, 0
      %s134 = sadd.s32 %s133, 1
      %s135 = scalar_select %p132, %s133, %s134
      %p138 = pneg %p132
      %p139 = scmp.eq.s32.totalorder %s13, 1
      %p140 = por %p138, %p139
      %p141 = scmp.ne.s32.totalorder %s133, %s136
      %p142 = scmp.eq.s32.totalorder %s13, 0
      %p143 = por %p141, %p142
      %p144 = scmp.ne.s32.totalorder %s133, %s136
      %p145 = scmp.eq.s32.totalorder %s18, 1
      %p146 = por %p144, %p145
      %p147 = scmp.ne.s32.totalorder %s136, %s137
      %p148 = scmp.eq.s32.totalorder %s18, 0
      %p149 = por %p147, %p148
      %p150 = scmp.ne.s32.totalorder %s136, %s137
      %p151 = scmp.eq.s32.totalorder %s19, 1
      %p152 = por %p150, %p151
      %p154 = scmp.ne.s32.totalorder %s137, %s153
      %p155 = scmp.eq.s32.totalorder %s19, 0
      %p156 = por %p154, %p155
      %p157 = scmp.le.s32.totalorder 1, %s13
      %p158 = scmp.lt.s32.totalorder %s13, 3
      %p159 = pnand %p157, %p158
      %p160 = pneg %p159
      // Predicated region
      $region9: #{down_forward.3} parent=5 // pred_check
        _
      $region10: #{down_forward.3} parent=5 // pred_check_branch
        %162 = sbr.rel (%p159) target = $region12
      $region11: #{down_forward.3} parent=5 // pred_region
        %s163 = ssub.s32 %s13, 1
        // Predicated region
        $region13: #{down_forward.3} parent=11 // pred_check
          %p164 = pneg %p100
        $region14: #{down_forward.3} parent=11 // pred_check_branch
          %166 = sbr.rel (%p164) target = $region16
        $region15: #{down_forward.3} parent=11 // pred_region
          _
        $region16: #{down_forward.3} parent=11 // pred_fallthru
          _
        // Predicated region
        $region17: #{down_forward.3} parent=11 // pred_check
          %p167 = pneg %p121
        $region18: #{down_forward.3} parent=11 // pred_check_branch
          %169 = sbr.rel (%p167) target = $region20
        $region19: #{down_forward.3} parent=11 // pred_region
          _
        $region20: #{down_forward.3} parent=11 // pred_fallthru
          _
      $region12: #{down_forward.3} parent=5 // pred_fallthru
        _
      %p170 = scmp.lt.s32.totalorder %s13, 2
      // Predicated region
      $region21: #{down_forward.3} parent=5 // pred_check
        %p171 = pneg %p170
      $region22: #{down_forward.3} parent=5 // pred_check_branch
        %173 = sbr.rel (%p171) target = $region24
      $region23: #{down_forward.3} parent=5 // pred_region
        // Predicated region
        $region25: #{down_forward.3} parent=23 // pred_check
          %p174 = pneg %p47
        $region26: #{down_forward.3} parent=23 // pred_check_branch
          %176 = sbr.rel (%p174) target = $region28
        $region27: #{down_forward.3} parent=23 // pred_region
          %p177 = scmp.lt.s32.totalorder %s20, 1
          %s178 = scalar_select %p177, %s20, 1
          %p179 = scmp.lt.s32.totalorder %s21, 0
          %s180 = scalar_select %p179, %s21, 0
          %s181 = sadd.s32 %s180, %s178
          %s182 = smul.addr %s181, 4
          %s183 = scalar_lea.vmem %s0, %s182
        $region28: #{down_forward.3} parent=23 // pred_fallthru
          _
        // Predicated region
        $region29: #{down_forward.3} parent=23 // pred_check
          %p184 = pneg %p73
        $region30: #{down_forward.3} parent=23 // pred_check_branch
          %186 = sbr.rel (%p184) target = $region32
        $region31: #{down_forward.3} parent=23 // pred_region
          %p187 = scmp.lt.s32.totalorder %s20, 1
          %s188 = scalar_select %p187, %s20, 1
          %s189 = smul.addr %s188, 8
          %s190 = scalar_lea.vmem %s1, %s189
        $region32: #{down_forward.3} parent=23 // pred_fallthru
          _
      $region24: #{down_forward.3} parent=5 // pred_fallthru
        _
      %p191 = scmp.le.s32.totalorder 1, %s13
      %p192 = scmp.lt.s32.totalorder %s13, 3
      %p193 = pnand %p191, %p192
      %p194 = pneg %p193
      // Predicated region
      $region33: #{down_forward.3} parent=5 // pred_check
        _
      $region34: #{down_forward.3} parent=5 // pred_check_branch
        %196 = sbr.rel (%p193) target = $region36
      $region35: #{down_forward.3} parent=5 // pred_region
        %s197 = ssub.s32 %s13, 1
        %p198 = scmp.lt.s32.totalorder %s22, 1
        %s199 = scalar_select %p198, %s22, 1
        %p200 = scmp.lt.s32.totalorder %s23, 0
        %s201 = scalar_select %p200, %s23, 0
        %s202 = sadd.s32 %s201, %s199
        %s203 = smul.addr %s202, 4
        %s204 = scalar_lea.vmem %s0, %s203
        %p205 = pneg %p53
        %p206 = pneg %p50
        %p207 = scmp.lt.s32.totalorder %s22, 1
        %s208 = scalar_select %p207, %s22, 1
        %s209 = smul.addr %s208, 8
        %s210 = scalar_lea.vmem %s1, %s209
        %p211 = pneg %p79
        %p212 = pneg %p76
        %p213 = pneg %p100
        %p214 = pneg %p97
        %p215 = pneg %p121
        %p216 = pneg %p118
        %p217 = pneg %p149
        %p218 = pneg %p146
        %s219 = sand.u32 %s136, 1
        %s220 = scalar_lea.sflag [#allocation3], %s219
        %s221 = sand.u32 %s136, 1
        %s222 = smul.addr %s221, 8
        %s223 = scalar_lea.vmem [#allocation2], %s222
        %p224 = scmp.lt.s32.totalorder %s22, 1
        %s225 = scalar_select %p224, %s22, 1
        %p226 = scmp.lt.s32.totalorder %s23, 0
        %s227 = scalar_select %p226, %s23, 0
        %s228 = sadd.s32 %s227, %s225
        %s229 = smul.addr %s228, 4
        %s230 = scalar_lea.vmem %s0, %s229
        %p231 = scmp.lt.s32.totalorder %s22, 1
        %s232 = scalar_select %p231, %s22, 1
        %s233 = smul.addr %s232, 8
        %s234 = scalar_lea.vmem %s1, %s233
        %v236 = vld [vmem:[%s230] sm:$0xf]
        %v237 = vld [vmem:[%s2] sm:$0xf]
        %s238 = scalar_lea.vmem %s2, 4
        %v239 = vld [vmem:[%s238] sm:$0xf]
        %vm240 = vcmask 64512
        %v242 = vsel %vm240, %v239, 0
        %vm244 = vcmask 1043456
        %v246 = vsel %vm244, %v236, 0
        %248 = vmatprep.subr.bf16.mxu0 0
        %249 = vmatpush1.bf16.msra.mxu0 %v246
        %250 = vmatprep.subr.bf16.mxu0 0
        %251 = vmatpush1.bf16.msra.mxu0 0
        %252 = vmatprep.subr.bf16.mxu0 0
        %253 = vmatpush1.bf16.msra.mxu0 0
        %254 = vmatprep.subr.bf16.mxu0 0
        %255 = vmatpush1.bf16.msra.mxu0 0
        %256 = vmatprep.subr.bf16.mxu0 0
        %257 = vmatpush1.bf16.msra.mxu0 0
        %258 = vmatprep.subr.bf16.mxu0 0
        %259 = vmatpush1.bf16.msra.mxu0 0
        %260 = vmatprep.subr.bf16.mxu0 0
        %261 = vmatpush1.bf16.msra.mxu0 0
        %262 = vmatprep.subr.bf16.mxu0 0
        %263 = vmatpush1.bf16.msra.mxu0 0
        %264 = vmatprep.subr.bf16.mxu0 0
        %265 = vmatpush1.bf16.msra.mxu0 0
        %266 = vmatprep.subr.bf16.mxu0 0
        %267 = vmatpush1.bf16.msra.mxu0 0
        %268 = vmatprep.subr.bf16.mxu0 0
        %269 = vmatpush1.bf16.msra.mxu0 0
        %270 = vmatprep.subr.bf16.mxu0 0
        %271 = vmatpush1.bf16.msra.mxu0 0
        %272 = vmatprep.subr.bf16.mxu0 0
        %273 = vmatpush1.bf16.msra.mxu0 0
        %274 = vmatprep.subr.bf16.mxu0 0
        %275 = vmatpush1.bf16.msra.mxu0 0
        %276 = vmatprep.subr.bf16.mxu0 0
        %277 = vmatpush1.bf16.msra.mxu0 0
        %278 = vmatprep.subr.bf16.mxu0 0
        %279 = vmatpush1.bf16.msra.mxu0 0
        %280 = vmatprep.mubr.bf16.mxu0 0
        %281 = vmatmul.mubr.bf16.gmra.mrb[0].mxu0 %v242
        %v282 = vpop.f32.mrb[0].mxu0
        %v283 = vadd.f32 0.0, %v282
        %v284 = vpop.f32.mrb[0].mxu0
        %v285 = vpop.f32.mrb[0].mxu0
        %v286 = vpop.f32.mrb[0].mxu0
        %287 = vdwg.mxu0
        %v288 = vld [vmem:[%s234] sm:$0xff]
        %v289 = vlaneseq
        %v290 = vand.u32 %v289, 127
        %v291 = vstv %s23
        %vm292 = vcmp.eq.s32.totalorder %v290, %v291
        %v293 = vsel %vm292, %v288, 0.0
        %v294 = vadd.f32 %v293, 0.0
        %296 = vrot.lane.b32.xlu0 %v283, 127
        %v297 = vpop.permute.xlu0 %296
        %299 = vrot.lane.b32.xlu0 %v283, 7
        %v300 = vpop.permute.xlu0 %299
        %vm302 = vcmask 56320
        %v303 = vsel %vm302, %v297, %v300
        %vm304 = vcmp.eq.s32.totalorder %v290, 7
        %306 = vset.pattern.permute.xlu0 0
        %307 = vperm.xlu0 %306, %v294
        %v308 = vpop.permute.xlu0 %307
        %v310 = vsel %vm304, %v308, %v303
        %v312 = vsel %vm240, %v237, 0
        %314 = vmatprep.subr.bf16.mxu0 0
        %315 = vmatpush1.bf16.msra.mxu0 %v246
        %316 = vmatprep.subr.bf16.mxu0 0
        %317 = vmatpush1.bf16.msra.mxu0 0
        %318 = vmatprep.subr.bf16.mxu0 0
        %319 = vmatpush1.bf16.msra.mxu0 0
        %320 = vmatprep.subr.bf16.mxu0 0
        %321 = vmatpush1.bf16.msra.mxu0 0
        %322 = vmatprep.subr.bf16.mxu0 0
        %323 = vmatpush1.bf16.msra.mxu0 0
        %324 = vmatprep.subr.bf16.mxu0 0
        %325 = vmatpush1.bf16.msra.mxu0 0
        %326 = vmatprep.subr.bf16.mxu0 0
        %327 = vmatpush1.bf16.msra.mxu0 0
        %328 = vmatprep.subr.bf16.mxu0 0
        %329 = vmatpush1.bf16.msra.mxu0 0
        %330 = vmatprep.subr.bf16.mxu0 0
        %331 = vmatpush1.bf16.msra.mxu0 0
        %332 = vmatprep.subr.bf16.mxu0 0
        %333 = vmatpush1.bf16.msra.mxu0 0
        %334 = vmatprep.subr.bf16.mxu0 0
        %335 = vmatpush1.bf16.msra.mxu0 0
        %336 = vmatprep.subr.bf16.mxu0 0
        %337 = vmatpush1.bf16.msra.mxu0 0
        %338 = vmatprep.subr.bf16.mxu0 0
        %339 = vmatpush1.bf16.msra.mxu0 0
        %340 = vmatprep.subr.bf16.mxu0 0
        %341 = vmatpush1.bf16.msra.mxu0 0
        %342 = vmatprep.subr.bf16.mxu0 0
        %343 = vmatpush1.bf16.msra.mxu0 0
        %344 = vmatprep.subr.bf16.mxu0 0
        %345 = vmatpush1.bf16.msra.mxu0 0
        %346 = vmatprep.mubr.bf16.mxu0 0
        %347 = vmatmul.mubr.bf16.gmra.mrb[0].mxu0 %v312
        %v348 = vpop.f32.mrb[0].mxu0
        %v349 = vadd.f32 %v310, %v348
        %v350 = vpop.f32.mrb[0].mxu0
        %v351 = vpop.f32.mrb[0].mxu0
        %v352 = vpop.f32.mrb[0].mxu0
        %353 = vdwg.mxu0
        %v354 = vld [vmem:[%s3] sm:$0xff]
        %356 = vset.pattern.permute.xlu0 0
        %357 = vperm.xlu0 %356, %v354
        %v358 = vpop.permute.xlu0 %357
        %v360 = vmul.f32 %v349, %v358
        %361 = vset.pattern.permute.xlu0 1
        %362 = vperm.xlu0 %361, %v354
        %v363 = vpop.permute.xlu0 %362
        %v365 = vadd.f32 %v360, %v363
        %v366 = vmax.f32 %v365, 0.0
        %367 = vst.msk [vmem:[%s223] sm:$0xff] %vm240, %v366
        %s368 = sand.u32 %s136, 1
        %s369 = scalar_lea.sflag [#allocation3], %s368
        %s370 = sand.u32 %s136, 1
        %s371 = smul.addr %s370, 8
        %s372 = scalar_lea.vmem [#allocation2], %s371
        // Predicated region
        $region37: #{down_forward.3} parent=35 // pred_check
          %p373 = pneg %p146
        $region38: #{down_forward.3} parent=35 // pred_check_branch
          %375 = sbr.rel (%p373) target = $region40
        $region39: #{down_forward.3} parent=35 // pred_region
          %s377 = ssub.s32 128, 128
          %378 = vsyncadd %s369, %s377
          %s379 = sadd.s32 %s23, %s22
          %s380 = smul.addr %s379, 128
          %s381 = scalar_lea.hbm %s4, %s380
          %s383 = sshll.u32 %s372, 4
          %s384 = int_to_ptr.vmem [resolvable:$true] %s383
          %386 = dma.vmem_to_hbm [thread:$0]  %s384, 128, %s381, %s369
        $region40: #{down_forward.3} parent=35 // pred_fallthru
          _
      $region36: #{down_forward.3} parent=5 // pred_fallthru
        _
      %p387 = scmp.le.s32.totalorder 2, %s13
      // Predicated region
      $region41: #{down_forward.3} parent=5 // pred_check
        %p388 = pneg %p387
      $region42: #{down_forward.3} parent=5 // pred_check_branch
        %390 = sbr.rel (%p388) target = $region44
      $region43: #{down_forward.3} parent=5 // pred_region
        %s391 = ssub.s32 %s13, 2
        // Predicated region
        $region45: #{down_forward.3} parent=43 // pred_check
          %p392 = pneg %p152
        $region46: #{down_forward.3} parent=43 // pred_check_branch
          %394 = sbr.rel (%p392) target = $region48
        $region47: #{down_forward.3} parent=43 // pred_region
          %s395 = sand.u32 %s137, 1
          %s396 = scalar_lea.sflag [#allocation3], %s395
          %s397 = sand.u32 %s137, 1
          %s398 = smul.addr %s397, 8
          %s399 = scalar_lea.vmem [#allocation2], %s398
          %400 = dma.done %s396, 128
        $region48: #{down_forward.3} parent=43 // pred_fallthru
          _
      $region44: #{down_forward.3} parent=5 // pred_fallthru
        _
    $region6: #{down_forward.3} parent=1 // loop_footer
      %s17 = sadd.s32 1, %s13
    $region7: #{down_forward.3} parent=1 // loop_footer_branch
      %12 = sbr.rel target = $region3
    $region8: #{down_forward.3} parent=1 // loop_exit
      _
    %401 = vsyncpa [#allocation3], 1
    %s402 = scalar_lea.sflag [#allocation3], 1
    %403 = vsyncpa %s402, 1

</llo_original>
